<compile_context>
chip_gen: v7x
topology: tpu7x:2x2x1
jax: 0.10.0
libtpu: 0.0.40
codegen_flags: <defaults>
</compile_context>

<pallas_src>
import functools
import math

import jax
import jax.numpy as jnp
from jax import lax
from jax.experimental import pallas as pl
from jax.experimental.pallas import tpu as pltpu


# -----------------------------------------------------------------------------
# Fused kernel: GroupNorm -> 1x1 conv (+folded affine) + SiLU
#               -> depthwise conv(K, s=2, p=1) -> + linear-interp residual
# -----------------------------------------------------------------------------
def vl_residual_kernel(x_ref, gnmat_ref, w_pw_ref, b_pw_ref,
                       w_dw_ref, b_dw_ref, interp_ref,
                       o_ref, yp_ref, *,
                       eps, ksize, stride, bt, t_in, t_in_p, t_out_p, t_scr):
    cp = x_ref.shape[-1]
    x = x_ref[...]                                   # (Bt, Tin_p, Cp) f32

    # ---- GroupNorm stats: per-sample sums, ONE merged matmul ----------------
    col_sum = jnp.sum(x, axis=1)                     # (Bt, Cp)
    col_sq = jnp.sum(x * x, axis=1)                  # (Bt, Cp)
    stats = jnp.concatenate([col_sum, col_sq], axis=0)          # (2*Bt, Cp)
    stats = jnp.dot(stats, gnmat_ref[...], preferred_element_type=jnp.float32)
    mean = stats[:bt]                                # (Bt, Cp)
    # NOTE: one-pass var = E[x^2] - mean^2 (fine for normalized activations).
    var = stats[bt:] - mean * mean
    inv = lax.rsqrt(var + eps)
    h = (x - mean[:, None, :]) * inv[:, None, :]     # (Bt, Tin_p, Cp)

    # ---- 1x1 conv (GN affine pre-folded into weights) + SiLU, one big matmul
    h_flat = h.reshape(bt * t_in_p, cp)
    y = jnp.dot(h_flat, w_pw_ref[...],
                preferred_element_type=jnp.float32) + b_pw_ref[...]
    y = y * jax.nn.sigmoid(y)                        # (Bt*Tin_p, Cp)

    # ---- residual: linear interp(x -> Tout) as ONE block-diagonal matmul ----
    x_flat = x.reshape(bt * t_in_p, cp)
    res = jnp.dot(interp_ref[...], x_flat,
                  preferred_element_type=jnp.float32)            # (Bt*Tout_p, Cp)

    # ---- depthwise conv (K, stride=2, pad=1): taps via strided sublane loads
    w_dw = w_dw_ref[...]                             # (K, Cp)
    b_dw = jnp.broadcast_to(b_dw_ref[...], (t_out_p, cp))
    zrow = jnp.zeros((1, cp), jnp.float32)
    ztail = jnp.zeros((t_scr - t_in - 1, cp), jnp.float32)
    for bi in range(bt):                             # static, small batch tile
        base = bi * t_scr
        yp_ref[base:base + 1, :] = zrow                          # left pad
        yp_ref[base + 1:base + 1 + t_in, :] = y[bi * t_in_p:bi * t_in_p + t_in, :]
        yp_ref[base + t_in + 1:base + t_scr, :] = ztail          # right pad + slack
        acc = b_dw
        for k in range(ksize):
            tap = yp_ref[pl.ds(base + k, t_out_p, stride=stride), :]
            acc = acc + tap * w_dw[k:k + 1, :]
        o_ref[bi] = (acc + res[bi * t_out_p:(bi + 1) * t_out_p, :]).astype(o_ref.dtype)


# -----------------------------------------------------------------------------
# Wrapper: layout plumbing (NCW <-> channels-last, padding) + specs
# -----------------------------------------------------------------------------
def _round_up(v, m):
    return ((v + m - 1) // m) * m


def variable_length_residual(x_ncw, params, num_groups, eps=1e-5, batch_tile=8):
    B, C, T = x_ncw.shape
    K = params["dw_w"].shape[2]
    stride = 2
    assert C % num_groups == 0
    assert T + 2 >= K                        # keep coupled with the Tout formula
    Tout = (T + 2 - K) // stride + 1
    Cp = _round_up(C, 128)
    cg = C // num_groups

    Bt = max(1, min(batch_tile, B))          # samples per grid step
    Bpad = _round_up(B, Bt)
    Tin_p = _round_up(T, 8)
    Tout_p = _round_up(Tout, 8)
    Tscr = _round_up(max(T + 2, K + stride * (Tout_p - 1)), 8)

    # channels-last + zero padding -> every block lane/sublane dense
    x = jnp.transpose(x_ncw, (0, 2, 1))                      # (B, T, C)
    x = jnp.pad(x, ((0, Bpad - B), (0, Tin_p - T), (0, Cp - C)))
    # TODO(synk): keep the whole encoder channels-last so these transpose/pad
    # HBM passes (and the final slice/transpose) disappear entirely.

    # group-averaging matrix: M[c, c'] = 1/(T*cg) iff c, c' in same real group
    ch = jnp.arange(Cp)
    gid = jnp.where(ch < C, ch // cg, -1)
    same = (gid[:, None] == gid[None, :]) & (gid[:, None] >= 0)
    gnmat = same.astype(jnp.float32) / float(T * cg)

    # fold GroupNorm affine (gamma, beta) into the 1x1 conv (linear -> exact)
    w_pw = jnp.transpose(params["pw_w"][:, :, 0])            # (Cin, Cout)
    w_pw_f = params["gn_w"][:, None] * w_pw
    b_pw_f = params["gn_b"] @ w_pw + params["pw_b"]
    w_pw_f = jnp.pad(w_pw_f, ((0, Cp - C), (0, Cp - C)))
    b_pw_f = jnp.pad(b_pw_f, (0, Cp - C)).reshape(1, Cp)

    w_dw = jnp.pad(jnp.transpose(params["dw_w"][:, 0, :]), ((0, 0), (0, Cp - C)))
    b_dw = jnp.pad(params["dw_b"], (0, Cp - C)).reshape(1, Cp)

    # linear interpolation (align_corners=False) as a (Tout, T) matrix,
    # zero-padded and made block-diagonal over the Bt-sample tile
    scale = T / Tout
    i = jnp.arange(Tout, dtype=jnp.float32)
    src = jnp.maximum((i + 0.5) * scale - 0.5, 0.0)
    x0 = jnp.clip(jnp.floor(src).astype(jnp.int32), 0, T - 1)
    x1 = jnp.minimum(x0 + 1, T - 1)
    w = src - x0.astype(jnp.float32)
    cols = jnp.arange(T)[None, :]
    interp = ((cols == x0[:, None]).astype(jnp.float32) * (1.0 - w)[:, None]
              + (cols == x1[:, None]).astype(jnp.float32) * w[:, None])
    interp = jnp.pad(interp, ((0, Tout_p - Tout), (0, Tin_p - T)))
    interp_big = jnp.kron(jnp.eye(Bt, dtype=jnp.float32), interp)  # (Bt*Tout_p, Bt*Tin_p)

    kernel = functools.partial(
        vl_residual_kernel, eps=eps, ksize=K, stride=stride,
        bt=Bt, t_in=T, t_in_p=Tin_p, t_out_p=Tout_p, t_scr=Tscr)

    out = pl.pallas_call(
        kernel,
        out_shape=jax.ShapeDtypeStruct((Bpad, Tout_p, Cp), jnp.float32),
        grid=(Bpad // Bt,),
        in_specs=[
            pl.BlockSpec((Bt, Tin_p, Cp), lambda g: (g, 0, 0)),          # x tile
            pl.BlockSpec((Cp, Cp), lambda g: (0, 0)),                    # group-avg mat
            pl.BlockSpec((Cp, Cp), lambda g: (0, 0)),                    # pw W (folded)
            pl.BlockSpec((1, Cp), lambda g: (0, 0)),                     # pw b (folded)
            pl.BlockSpec((K, Cp), lambda g: (0, 0)),                     # dw W
            pl.BlockSpec((1, Cp), lambda g: (0, 0)),                     # dw b
            pl.BlockSpec((Bt * Tout_p, Bt * Tin_p), lambda g: (0, 0)),   # interp (block-diag)
        ],
        out_specs=pl.BlockSpec((Bt, Tout_p, Cp), lambda g: (g, 0, 0)),
        scratch_shapes=[pltpu.VMEM((Bt * Tscr, Cp), jnp.float32)],       # time-padded act
        compiler_params=pltpu.CompilerParams(dimension_semantics=("parallel",)),
    )(x, gnmat, w_pw_f, b_pw_f, w_dw, b_dw, interp_big)

    return jnp.transpose(out[:B, :Tout, :C], (0, 2, 1))                  # (B, C, Tout)


# -----------------------------------------------------------------------------
# Pure-JAX reference (mirrors the PyTorch module)
# -----------------------------------------------------------------------------
def reference_forward(x_ncw, p, num_groups, eps=1e-5):
    B, C, T = x_ncw.shape
    cg = C // num_groups
    hi = lax.Precision.HIGHEST

    xg = x_ncw.reshape(B, num_groups, cg * T)
    mean = jnp.mean(xg, axis=-1, keepdims=True)
    var = jnp.mean((xg - mean) ** 2, axis=-1, keepdims=True)
    xn = ((xg - mean) / jnp.sqrt(var + eps)).reshape(B, C, T)
    xn = xn * p["gn_w"][None, :, None] + p["gn_b"][None, :, None]

    h = jnp.einsum("oc,bct->bot", p["pw_w"][:, :, 0], xn,
                   precision=hi) + p["pw_b"][None, :, None]
    h = h * jax.nn.sigmoid(h)

    K = p["dw_w"].shape[2]
    Tout = (T + 2 - K) // 2 + 1
    hp = jnp.pad(h, ((0, 0), (0, 0), (1, 1)))
    taps = jnp.stack([hp[:, :, k:k + 2 * (Tout - 1) + 1:2] for k in range(K)], axis=0)
    out = jnp.einsum("kbct,ck->bct", taps, p["dw_w"][:, 0, :],
                     precision=hi) + p["dw_b"][None, :, None]

    scale = T / Tout
    i = jnp.arange(Tout, dtype=jnp.float32)
    src = jnp.maximum((i + 0.5) * scale - 0.5, 0.0)
    x0 = jnp.clip(jnp.floor(src).astype(jnp.int32), 0, T - 1)
    x1 = jnp.minimum(x0 + 1, T - 1)
    w = src - x0.astype(jnp.float32)
    res = (x_ncw[:, :, x0] * (1.0 - w)[None, None, :]
           + x_ncw[:, :, x1] * w[None, None, :])
    return out + res


if __name__ == "__main__":
    B, C, T = 4, 64, 32          # C=64 is zero-padded to 128 lanes inside the wrapper
    num_groups = C // 32         # 2, as in the l2augment encoder blocks
    K = 7

    key = jax.random.PRNGKey(0)
    ks = jax.random.split(key, 7)
    x = jax.random.normal(ks[0], (B, C, T), jnp.float32)
    params = {
        "gn_w": 1.0 + 0.1 * jax.random.normal(ks[1], (C,), jnp.float32),
        "gn_b": 0.1 * jax.random.normal(ks[2], (C,), jnp.float32),
        "pw_w": jax.random.normal(ks[3], (C, C, 1), jnp.float32) / math.sqrt(C),
        "pw_b": 0.02 * jax.random.normal(ks[4], (C,), jnp.float32),
        "dw_w": jax.random.normal(ks[5], (C, 1, K), jnp.float32) / math.sqrt(K),
        "dw_b": 0.02 * jax.random.normal(ks[6], (C,), jnp.float32),
    }

    fwd = jax.jit(functools.partial(variable_length_residual,
                                    num_groups=num_groups, batch_tile=2))
    out = fwd(x, params)
    jax.block_until_ready(out)

    Tout = (T + 2 - K) // 2 + 1
    ref = reference_forward(x, params, num_groups)
    assert out.shape == (B, C, Tout), out.shape
    assert bool(jnp.all(jnp.isfinite(out)))
    err = float(jnp.max(jnp.abs(out - ref)))
    assert err < 2e-3, f"max abs error {err}"
    print("KERNEL_OK")
</pallas_src>

<mosaic_0001>
module attributes {stable_mosaic.version = 11 : i64} {
  func.func @vl_residual_kernel(%arg0: i32, %arg1: memref<2x32x128xf32, #tpu.memory_space<vmem>>, %arg2: memref<128x128xf32, #tpu.memory_space<vmem>>, %arg3: memref<128x128xf32, #tpu.memory_space<vmem>>, %arg4: memref<1x128xf32, #tpu.memory_space<vmem>>, %arg5: memref<7x128xf32, #tpu.memory_space<vmem>>, %arg6: memref<1x128xf32, #tpu.memory_space<vmem>>, %arg7: memref<32x64xf32, #tpu.memory_space<vmem>>, %arg8: memref<2x16x128xf32, #tpu.memory_space<vmem>>, %arg9: memref<80x128xf32, #tpu.memory_space<vmem>>) attributes {dimension_semantics = [#tpu.dimension_semantics<parallel>], iteration_bounds = array<i64: 2>, scalar_prefetch = 0 : i64, scratch_operands = 1 : i64, tpu.core_type = #tpu.core_type<tc>, window_params = [{transform_indices = @transform_0, window_bounds = array<i64: 2, 32, 128>}, {pipeline_mode = #tpu.pipeline_mode<synchronous>, transform_indices = @transform_1, window_bounds = array<i64: 128, 128>}, {pipeline_mode = #tpu.pipeline_mode<synchronous>, transform_indices = @transform_2, window_bounds = array<i64: 128, 128>}, {pipeline_mode = #tpu.pipeline_mode<synchronous>, transform_indices = @transform_3, window_bounds = array<i64: 1, 128>}, {pipeline_mode = #tpu.pipeline_mode<synchronous>, transform_indices = @transform_4, window_bounds = array<i64: 7, 128>}, {pipeline_mode = #tpu.pipeline_mode<synchronous>, transform_indices = @transform_5, window_bounds = array<i64: 1, 128>}, {pipeline_mode = #tpu.pipeline_mode<synchronous>, transform_indices = @transform_6, window_bounds = array<i64: 32, 64>}, {transform_indices = @transform_7, window_bounds = array<i64: 2, 16, 128>}]} {
    %c0 = arith.constant 0 : index
    %c0_0 = arith.constant 0 : index
    %c0_1 = arith.constant 0 : index
    %0 = vector.load %arg1[%c0, %c0_0, %c0_1] : memref<2x32x128xf32, #tpu.memory_space<vmem>>, vector<2x32x128xf32>
    %cst = arith.constant dense<0.000000e+00> : vector<2x128xf32>
    %1 = vector.multi_reduction <add>, %0, %cst [1] : vector<2x32x128xf32> to vector<2x128xf32>
    %2 = arith.mulf %0, %0 : vector<2x32x128xf32>
    %cst_2 = arith.constant dense<0.000000e+00> : vector<2x128xf32>
    %3 = vector.multi_reduction <add>, %2, %cst_2 [1] : vector<2x32x128xf32> to vector<2x128xf32>
    %4 = tpu.concatenate %1, %3 in 0 : vector<2x128xf32>, vector<2x128xf32> -> vector<4x128xf32>
    %c0_3 = arith.constant 0 : index
    %c0_4 = arith.constant 0 : index
    %5 = vector.load %arg2[%c0_3, %c0_4] : memref<128x128xf32, #tpu.memory_space<vmem>>, vector<128x128xf32>
    %cst_5 = arith.constant dense<0.000000e+00> : vector<4x128xf32>
    %6 = tpu.matmul %4, %5, %cst_5 {dimension_numbers = #tpu.dot_dimension_numbers<[1], [0], [0], [1], [0, 0, 1, 1], [], []>} : vector<4x128xf32>, vector<128x128xf32>, vector<4x128xf32> -> vector<4x128xf32>
    %7 = vector.extract_strided_slice %6 {offsets = [0, 0], sizes = [2, 128], strides = [1, 1]} : vector<4x128xf32> to vector<2x128xf32>
    %8 = vector.extract_strided_slice %6 {offsets = [2, 0], sizes = [2, 128], strides = [1, 1]} : vector<4x128xf32> to vector<2x128xf32>
    %9 = arith.mulf %7, %7 : vector<2x128xf32>
    %10 = arith.subf %8, %9 : vector<2x128xf32>
    %cst_6 = arith.constant 9.99999974E-6 : f32
    %11 = vector.broadcast %cst_6 : f32 to vector<2x128xf32>
    %12 = arith.addf %10, %11 : vector<2x128xf32>
    %13 = math.rsqrt %12 : vector<2x128xf32>
    %14 = vector.shape_cast %7 : vector<2x128xf32> to vector<2x1x128xf32>
    %15 = vector.broadcast %14 : vector<2x1x128xf32> to vector<2x32x128xf32>
    %16 = arith.subf %0, %15 : vector<2x32x128xf32>
    %17 = vector.shape_cast %13 : vector<2x128xf32> to vector<2x1x128xf32>
    %18 = vector.broadcast %17 : vector<2x1x128xf32> to vector<2x32x128xf32>
    %19 = arith.mulf %16, %18 : vector<2x32x128xf32>
    %20 = vector.shape_cast %19 : vector<2x32x128xf32> to vector<64x128xf32>
    %c0_7 = arith.constant 0 : index
    %c0_8 = arith.constant 0 : index
    %21 = vector.load %arg3[%c0_7, %c0_8] : memref<128x128xf32, #tpu.memory_space<vmem>>, vector<128x128xf32>
    %cst_9 = arith.constant dense<0.000000e+00> : vector<64x128xf32>
    %22 = tpu.matmul %20, %21, %cst_9 {dimension_numbers = #tpu.dot_dimension_numbers<[1], [0], [0], [1], [0, 0, 1, 1], [], []>} : vector<64x128xf32>, vector<128x128xf32>, vector<64x128xf32> -> vector<64x128xf32>
    %c0_10 = arith.constant 0 : index
    %c0_11 = arith.constant 0 : index
    %23 = vector.load %arg4[%c0_10, %c0_11] : memref<1x128xf32, #tpu.memory_space<vmem>>, vector<1x128xf32>
    %24 = vector.broadcast %23 : vector<1x128xf32> to vector<64x128xf32>
    %25 = arith.addf %22, %24 : vector<64x128xf32>
    %26 = arith.negf %25 : vector<64x128xf32>
    %27 = math.exp %26 : vector<64x128xf32>
    %cst_12 = arith.constant 1.000000e+00 : f32
    %28 = vector.broadcast %cst_12 : f32 to vector<64x128xf32>
    %29 = arith.addf %28, %27 : vector<64x128xf32>
    %30 = arith.divf %28, %29 : vector<64x128xf32>
    %31 = arith.mulf %25, %30 : vector<64x128xf32>
    %32 = vector.shape_cast %0 : vector<2x32x128xf32> to vector<64x128xf32>
    %c0_13 = arith.constant 0 : index
    %c0_14 = arith.constant 0 : index
    %33 = vector.load %arg7[%c0_13, %c0_14] : memref<32x64xf32, #tpu.memory_space<vmem>>, vector<32x64xf32>
    %cst_15 = arith.constant dense<0.000000e+00> : vector<32x128xf32>
    %34 = tpu.matmul %33, %32, %cst_15 {dimension_numbers = #tpu.dot_dimension_numbers<[1], [0], [0], [1], [0, 0, 1, 1], [], []>} : vector<32x64xf32>, vector<64x128xf32>, vector<32x128xf32> -> vector<32x128xf32>
    %c0_16 = arith.constant 0 : index
    %c0_17 = arith.constant 0 : index
    %35 = vector.load %arg5[%c0_16, %c0_17] : memref<7x128xf32, #tpu.memory_space<vmem>>, vector<7x128xf32>
    %c0_18 = arith.constant 0 : index
    %c0_19 = arith.constant 0 : index
    %36 = vector.load %arg6[%c0_18, %c0_19] : memref<1x128xf32, #tpu.memory_space<vmem>>, vector<1x128xf32>
    %37 = vector.shape_cast %36 : vector<1x128xf32> to vector<1x128xf32>
    %38 = vector.broadcast %37 : vector<1x128xf32> to vector<16x128xf32>
    %cst_20 = arith.constant 0.000000e+00 : f32
    %39 = vector.broadcast %cst_20 : f32 to vector<1x128xf32>
    %cst_21 = arith.constant 0.000000e+00 : f32
    %40 = vector.broadcast %cst_21 : f32 to vector<7x128xf32>
    %c0_22 = arith.constant 0 : index
    %c0_23 = arith.constant 0 : index
    %41 = vector.load %arg9[%c0_22, %c0_23] : memref<80x128xf32, #tpu.memory_space<vmem>>, vector<1x128xf32>
    tpu.vector_store %arg9[%c0_22, %c0_23], %39 {strides = array<i32>} : memref<80x128xf32, #tpu.memory_space<vmem>>, vector<1x128xf32>,
    %42 = vector.extract_strided_slice %31 {offsets = [0, 0], sizes = [32, 128], strides = [1, 1]} : vector<64x128xf32> to vector<32x128xf32>
    %c1 = arith.constant 1 : index
    %c0_24 = arith.constant 0 : index
    %43 = vector.load %arg9[%c1, %c0_24] : memref<80x128xf32, #tpu.memory_space<vmem>>, vector<32x128xf32>
    tpu.vector_store %arg9[%c1, %c0_24], %42 {strides = array<i32>} : memref<80x128xf32, #tpu.memory_space<vmem>>, vector<32x128xf32>,
    %c33 = arith.constant 33 : index
    %c0_25 = arith.constant 0 : index
    %44 = vector.load %arg9[%c33, %c0_25] : memref<80x128xf32, #tpu.memory_space<vmem>>, vector<7x128xf32>
    tpu.vector_store %arg9[%c33, %c0_25], %40 {strides = array<i32>} : memref<80x128xf32, #tpu.memory_space<vmem>>, vector<7x128xf32>,
    %c0_26 = arith.constant 0 : index
    %c0_27 = arith.constant 0 : index
    %45 = tpu.strided_load %arg9[%c0_26, %c0_27] {strides = array<i32: 2, 1>} : memref<80x128xf32, #tpu.memory_space<vmem>>, vector<16x128xf32>
    %46 = vector.extract_strided_slice %35 {offsets = [0, 0], sizes = [1, 128], strides = [1, 1]} : vector<7x128xf32> to vector<1x128xf32>
    %47 = vector.broadcast %46 : vector<1x128xf32> to vector<16x128xf32>
    %48 = arith.mulf %45, %47 : vector<16x128xf32>
    %49 = arith.addf %38, %48 : vector<16x128xf32>
    %c1_28 = arith.constant 1 : index
    %c0_29 = arith.constant 0 : index
    %50 = tpu.strided_load %arg9[%c1_28, %c0_29] {strides = array<i32: 2, 1>} : memref<80x128xf32, #tpu.memory_space<vmem>>, vector<16x128xf32>
    %51 = vector.extract_strided_slice %35 {offsets = [1, 0], sizes = [1, 128], strides = [1, 1]} : vector<7x128xf32> to vector<1x128xf32>
    %52 = vector.broadcast %51 : vector<1x128xf32> to vector<16x128xf32>
    %53 = arith.mulf %50, %52 : vector<16x128xf32>
    %54 = arith.addf %49, %53 : vector<16x128xf32>
    %c2 = arith.constant 2 : index
    %c0_30 = arith.constant 0 : index
    %55 = tpu.strided_load %arg9[%c2, %c0_30] {strides = array<i32: 2, 1>} : memref<80x128xf32, #tpu.memory_space<vmem>>, vector<16x128xf32>
    %56 = vector.extract_strided_slice %35 {offsets = [2, 0], sizes = [1, 128], strides = [1, 1]} : vector<7x128xf32> to vector<1x128xf32>
    %57 = vector.broadcast %56 : vector<1x128xf32> to vector<16x128xf32>
    %58 = arith.mulf %55, %57 : vector<16x128xf32>
    %59 = arith.addf %54, %58 : vector<16x128xf32>
    %c3 = arith.constant 3 : index
    %c0_31 = arith.constant 0 : index
    %60 = tpu.strided_load %arg9[%c3, %c0_31] {strides = array<i32: 2, 1>} : memref<80x128xf32, #tpu.memory_space<vmem>>, vector<16x128xf32>
    %61 = vector.extract_strided_slice %35 {offsets = [3, 0], sizes = [1, 128], strides = [1, 1]} : vector<7x128xf32> to vector<1x128xf32>
    %62 = vector.broadcast %61 : vector<1x128xf32> to vector<16x128xf32>
    %63 = arith.mulf %60, %62 : vector<16x128xf32>
    %64 = arith.addf %59, %63 : vector<16x128xf32>
    %c4 = arith.constant 4 : index
    %c0_32 = arith.constant 0 : index
    %65 = tpu.strided_load %arg9[%c4, %c0_32] {strides = array<i32: 2, 1>} : memref<80x128xf32, #tpu.memory_space<vmem>>, vector<16x128xf32>
    %66 = vector.extract_strided_slice %35 {offsets = [4, 0], sizes = [1, 128], strides = [1, 1]} : vector<7x128xf32> to vector<1x128xf32>
    %67 = vector.broadcast %66 : vector<1x128xf32> to vector<16x128xf32>
    %68 = arith.mulf %65, %67 : vector<16x128xf32>
    %69 = arith.addf %64, %68 : vector<16x128xf32>
    %c5 = arith.constant 5 : index
    %c0_33 = arith.constant 0 : index
    %70 = tpu.strided_load %arg9[%c5, %c0_33] {strides = array<i32: 2, 1>} : memref<80x128xf32, #tpu.memory_space<vmem>>, vector<16x128xf32>
    %71 = vector.extract_strided_slice %35 {offsets = [5, 0], sizes = [1, 128], strides = [1, 1]} : vector<7x128xf32> to vector<1x128xf32>
    %72 = vector.broadcast %71 : vector<1x128xf32> to vector<16x128xf32>
    %73 = arith.mulf %70, %72 : vector<16x128xf32>
    %74 = arith.addf %69, %73 : vector<16x128xf32>
    %c6 = arith.constant 6 : index
    %c0_34 = arith.constant 0 : index
    %75 = tpu.strided_load %arg9[%c6, %c0_34] {strides = array<i32: 2, 1>} : memref<80x128xf32, #tpu.memory_space<vmem>>, vector<16x128xf32>
    %76 = vector.extract_strided_slice %35 {offsets = [6, 0], sizes = [1, 128], strides = [1, 1]} : vector<7x128xf32> to vector<1x128xf32>
    %77 = vector.broadcast %76 : vector<1x128xf32> to vector<16x128xf32>
    %78 = arith.mulf %75, %77 : vector<16x128xf32>
    %79 = arith.addf %74, %78 : vector<16x128xf32>
    %80 = vector.extract_strided_slice %34 {offsets = [0, 0], sizes = [16, 128], strides = [1, 1]} : vector<32x128xf32> to vector<16x128xf32>
    %81 = arith.addf %79, %80 : vector<16x128xf32>
    %c0_35 = arith.constant 0 : index
    %c0_36 = arith.constant 0 : index
    %c0_37 = arith.constant 0 : index
    %82 = vector.load %arg8[%c0_35, %c0_36, %c0_37] : memref<2x16x128xf32, #tpu.memory_space<vmem>>, vector<1x16x128xf32>
    %83 = vector.shape_cast %82 : vector<1x16x128xf32> to vector<16x128xf32>
    %84 = vector.shape_cast %81 : vector<16x128xf32> to vector<1x16x128xf32>
    tpu.vector_store %arg8[%c0_35, %c0_36, %c0_37], %84 {strides = array<i32>} : memref<2x16x128xf32, #tpu.memory_space<vmem>>, vector<1x16x128xf32>,
    %c40 = arith.constant 40 : index
    %c0_38 = arith.constant 0 : index
    %85 = vector.load %arg9[%c40, %c0_38] : memref<80x128xf32, #tpu.memory_space<vmem>>, vector<1x128xf32>
    tpu.vector_store %arg9[%c40, %c0_38], %39 {strides = array<i32>} : memref<80x128xf32, #tpu.memory_space<vmem>>, vector<1x128xf32>,
    %86 = vector.extract_strided_slice %31 {offsets = [32, 0], sizes = [32, 128], strides = [1, 1]} : vector<64x128xf32> to vector<32x128xf32>
    %c41 = arith.constant 41 : index
    %c0_39 = arith.constant 0 : index
    %87 = vector.load %arg9[%c41, %c0_39] : memref<80x128xf32, #tpu.memory_space<vmem>>, vector<32x128xf32>
    tpu.vector_store %arg9[%c41, %c0_39], %86 {strides = array<i32>} : memref<80x128xf32, #tpu.memory_space<vmem>>, vector<32x128xf32>,
    %c73 = arith.constant 73 : index
    %c0_40 = arith.constant 0 : index
    %88 = vector.load %arg9[%c73, %c0_40] : memref<80x128xf32, #tpu.memory_space<vmem>>, vector<7x128xf32>
    tpu.vector_store %arg9[%c73, %c0_40], %40 {strides = array<i32>} : memref<80x128xf32, #tpu.memory_space<vmem>>, vector<7x128xf32>,
    %c40_41 = arith.constant 40 : index
    %c0_42 = arith.constant 0 : index
    %89 = tpu.strided_load %arg9[%c40_41, %c0_42] {strides = array<i32: 2, 1>} : memref<80x128xf32, #tpu.memory_space<vmem>>, vector<16x128xf32>
    %90 = vector.extract_strided_slice %35 {offsets = [0, 0], sizes = [1, 128], strides = [1, 1]} : vector<7x128xf32> to vector<1x128xf32>
    %91 = vector.broadcast %90 : vector<1x128xf32> to vector<16x128xf32>
    %92 = arith.mulf %89, %91 : vector<16x128xf32>
    %93 = arith.addf %38, %92 : vector<16x128xf32>
    %c41_43 = arith.constant 41 : index
    %c0_44 = arith.constant 0 : index
    %94 = tpu.strided_load %arg9[%c41_43, %c0_44] {strides = array<i32: 2, 1>} : memref<80x128xf32, #tpu.memory_space<vmem>>, vector<16x128xf32>
    %95 = vector.extract_strided_slice %35 {offsets = [1, 0], sizes = [1, 128], strides = [1, 1]} : vector<7x128xf32> to vector<1x128xf32>
    %96 = vector.broadcast %95 : vector<1x128xf32> to vector<16x128xf32>
    %97 = arith.mulf %94, %96 : vector<16x128xf32>
    %98 = arith.addf %93, %97 : vector<16x128xf32>
    %c42 = arith.constant 42 : index
    %c0_45 = arith.constant 0 : index
    %99 = tpu.strided_load %arg9[%c42, %c0_45] {strides = array<i32: 2, 1>} : memref<80x128xf32, #tpu.memory_space<vmem>>, vector<16x128xf32>
    %100 = vector.extract_strided_slice %35 {offsets = [2, 0], sizes = [1, 128], strides = [1, 1]} : vector<7x128xf32> to vector<1x128xf32>
    %101 = vector.broadcast %100 : vector<1x128xf32> to vector<16x128xf32>
    %102 = arith.mulf %99, %101 : vector<16x128xf32>
    %103 = arith.addf %98, %102 : vector<16x128xf32>
    %c43 = arith.constant 43 : index
    %c0_46 = arith.constant 0 : index
    %104 = tpu.strided_load %arg9[%c43, %c0_46] {strides = array<i32: 2, 1>} : memref<80x128xf32, #tpu.memory_space<vmem>>, vector<16x128xf32>
    %105 = vector.extract_strided_slice %35 {offsets = [3, 0], sizes = [1, 128], strides = [1, 1]} : vector<7x128xf32> to vector<1x128xf32>
    %106 = vector.broadcast %105 : vector<1x128xf32> to vector<16x128xf32>
    %107 = arith.mulf %104, %106 : vector<16x128xf32>
    %108 = arith.addf %103, %107 : vector<16x128xf32>
    %c44 = arith.constant 44 : index
    %c0_47 = arith.constant 0 : index
    %109 = tpu.strided_load %arg9[%c44, %c0_47] {strides = array<i32: 2, 1>} : memref<80x128xf32, #tpu.memory_space<vmem>>, vector<16x128xf32>
    %110 = vector.extract_strided_slice %35 {offsets = [4, 0], sizes = [1, 128], strides = [1, 1]} : vector<7x128xf32> to vector<1x128xf32>
    %111 = vector.broadcast %110 : vector<1x128xf32> to vector<16x128xf32>
    %112 = arith.mulf %109, %111 : vector<16x128xf32>
    %113 = arith.addf %108, %112 : vector<16x128xf32>
    %c45 = arith.constant 45 : index
    %c0_48 = arith.constant 0 : index
    %114 = tpu.strided_load %arg9[%c45, %c0_48] {strides = array<i32: 2, 1>} : memref<80x128xf32, #tpu.memory_space<vmem>>, vector<16x128xf32>
    %115 = vector.extract_strided_slice %35 {offsets = [5, 0], sizes = [1, 128], strides = [1, 1]} : vector<7x128xf32> to vector<1x128xf32>
    %116 = vector.broadcast %115 : vector<1x128xf32> to vector<16x128xf32>
    %117 = arith.mulf %114, %116 : vector<16x128xf32>
    %118 = arith.addf %113, %117 : vector<16x128xf32>
    %c46 = arith.constant 46 : index
    %c0_49 = arith.constant 0 : index
    %119 = tpu.strided_load %arg9[%c46, %c0_49] {strides = array<i32: 2, 1>} : memref<80x128xf32, #tpu.memory_space<vmem>>, vector<16x128xf32>
    %120 = vector.extract_strided_slice %35 {offsets = [6, 0], sizes = [1, 128], strides = [1, 1]} : vector<7x128xf32> to vector<1x128xf32>
    %121 = vector.broadcast %120 : vector<1x128xf32> to vector<16x128xf32>
    %122 = arith.mulf %119, %121 : vector<16x128xf32>
    %123 = arith.addf %118, %122 : vector<16x128xf32>
    %124 = vector.extract_strided_slice %34 {offsets = [16, 0], sizes = [16, 128], strides = [1, 1]} : vector<32x128xf32> to vector<16x128xf32>
    %125 = arith.addf %123, %124 : vector<16x128xf32>
    %c1_50 = arith.constant 1 : index
    %c0_51 = arith.constant 0 : index
    %c0_52 = arith.constant 0 : index
    %126 = vector.load %arg8[%c1_50, %c0_51, %c0_52] : memref<2x16x128xf32, #tpu.memory_space<vmem>>, vector<1x16x128xf32>
    %127 = vector.shape_cast %126 : vector<1x16x128xf32> to vector<16x128xf32>
    %128 = vector.shape_cast %125 : vector<16x128xf32> to vector<1x16x128xf32>
    tpu.vector_store %arg8[%c1_50, %c0_51, %c0_52], %128 {strides = array<i32>} : memref<2x16x128xf32, #tpu.memory_space<vmem>>, vector<1x16x128xf32>,
    return
  }
  func.func @transform_0(%arg0: i32) -> (i32, i32, i32) {
    %c0_i32 = arith.constant 0 : i32
    %c0_i32_0 = arith.constant 0 : i32
    %c0_i32_1 = arith.constant 0 : i32
    return %arg0, %c0_i32, %c0_i32_0 : i32, i32, i32
  }
  func.func @transform_1(%arg0: i32) -> (i32, i32) {
    %c0_i32 = arith.constant 0 : i32
    %c0_i32_0 = arith.constant 0 : i32
    %c0_i32_1 = arith.constant 0 : i32
    return %c0_i32, %c0_i32_0 : i32, i32
  }
  func.func @transform_2(%arg0: i32) -> (i32, i32) {
    %c0_i32 = arith.constant 0 : i32
    %c0_i32_0 = arith.constant 0 : i32
    %c0_i32_1 = arith.constant 0 : i32
    return %c0_i32, %c0_i32_0 : i32, i32
  }
  func.func @transform_3(%arg0: i32) -> (i32, i32) {
    %c0_i32 = arith.constant 0 : i32
    %c0_i32_0 = arith.constant 0 : i32
    %c0_i32_1 = arith.constant 0 : i32
    return %c0_i32, %c0_i32_0 : i32, i32
  }
  func.func @transform_4(%arg0: i32) -> (i32, i32) {
    %c0_i32 = arith.constant 0 : i32
    %c0_i32_0 = arith.constant 0 : i32
    %c0_i32_1 = arith.constant 0 : i32
    return %c0_i32, %c0_i32_0 : i32, i32
  }
  func.func @transform_5(%arg0: i32) -> (i32, i32) {
    %c0_i32 = arith.constant 0 : i32
    %c0_i32_0 = arith.constant 0 : i32
    %c0_i32_1 = arith.constant 0 : i32
    return %c0_i32, %c0_i32_0 : i32, i32
  }
  func.func @transform_6(%arg0: i32) -> (i32, i32) {
    %c0_i32 = arith.constant 0 : i32
    %c0_i32_0 = arith.constant 0 : i32
    %c0_i32_1 = arith.constant 0 : i32
    return %c0_i32, %c0_i32_0 : i32, i32
  }
  func.func @transform_7(%arg0: i32) -> (i32, i32, i32) {
    %c0_i32 = arith.constant 0 : i32
    %c0_i32_0 = arith.constant 0 : i32
    %c0_i32_1 = arith.constant 0 : i32
    return %arg0, %c0_i32, %c0_i32_0 : i32, i32, i32
  }
}

</mosaic_0001>

<llo_original>
// kernel: variable_length_residual.1
$region0: #{variable_length_residual.1}
  #allocation0 [shape = 'u32[]', space=smem, size = 0x4, offset = 0x4, fixed_abs, tag = 'smem constant byte address 0x4 - core index']
  #allocation1 [shape = 'u32[144,128]{1,0:T(1,128)}', space=vmem, size = 0x12000, scoped, tag = 'internal scratch']
  #allocation2 [shape = 'f32[80,128]{1,0:T(8,128)}', space=vmem, size = 0xa000, scoped, tag = 'scratch operand']
  %s0 = inlined_call_operand.vmem [shape: f32[4,32,128], index: 0, kind: input, shape index: {}]
  %s1 = inlined_call_operand.vmem [shape: f32[128,128], index: 1, kind: input, shape index: {}]
  %s2 = inlined_call_operand.vmem [shape: f32[128,128], index: 2, kind: input, shape index: {}]
  %s3 = inlined_call_operand.vmem [shape: f32[1,128], index: 3, kind: input, shape index: {}]
  %s4 = inlined_call_operand.vmem [shape: f32[7,128], index: 4, kind: input, shape index: {}]
  %s5 = inlined_call_operand.vmem [shape: f32[1,128], index: 5, kind: input, shape index: {}]
  %s6 = inlined_call_operand.vmem [shape: f32[32,64], index: 6, kind: input, shape index: {}]
  %s7 = inlined_call_operand.vmem [shape: f32[4,16,128], index: 7, kind: output, shape index: {}]
  %s8 = sld [smem:[#allocation0]]
  $region61: #{variable_length_residual.1} parent=0
    _
  %s10 = ssub.s32 1, %s8
  %s11 = scalar_select 0, %s10, %s8
  loop: start=0, step=1, limit=4
  $region2: #{variable_length_residual.1} parent=0 // loop_pre_header
    _
  $region3: #{variable_length_residual.1} parent=0 // loop_header
    %s13 = sphi 0, %s17
    %p14 = scmp.ge.s32.totalorder %s13, 4
    %s23 = sphi 0, %s25
    %s26 = sphi 0, %s23
    %s27 = sphi 0, %s26
    %s43 = sphi 0, %s27
    %s47 = sphi 0, %s47
    %s49 = sphi 0, %s47
    %s50 = sphi 0, %s49
    %s64 = sphi 0, %s50
    %s68 = sphi 0, %s68
    %s70 = sphi 0, %s68
    %s71 = sphi 0, %s70
    %s85 = sphi 0, %s71
    %s89 = sphi 0, %s89
    %s91 = sphi 0, %s89
    %s92 = sphi 0, %s91
    %s106 = sphi 0, %s92
    %s110 = sphi 0, %s110
    %s112 = sphi 0, %s110
    %s113 = sphi 0, %s112
    %s127 = sphi 0, %s113
    %s131 = sphi 0, %s131
    %s133 = sphi 0, %s131
    %s134 = sphi 0, %s133
    %s148 = sphi 0, %s134
    %s152 = sphi 0, %s152
    %s154 = sphi 0, %s152
    %s155 = sphi 0, %s154
    %s169 = sphi 0, %s155
    %s175 = sphi 0, %s177
    %s178 = sphi 0, %s175
    %s179 = sphi 0, %s178
    %s195 = sphi 0, %s179
  $region4: #{variable_length_residual.1} parent=0 // loop_header_branch
    %16 = sbr.rel (%p14) target = $region8
  $region5: #{variable_length_residual.1} parent=0 // loop_body
    %s18 = ssub.s32 %s13, 1
    %s19 = ssub.s32 %s13, 2
    %s20 = sadd.s32 %s13, 1
    %s21 = ssub.s32 %s13, %s20
    %p22 = scmp.eq.s32.totalorder %s21, 0
    %s24 = sadd.s32 %s23, 1
    %s25 = scalar_select %p22, %s23, %s24
    %p28 = pneg %p22
    %p29 = scmp.eq.s32.totalorder %s13, 1
    %p30 = por %p28, %p29
    %p31 = scmp.ne.s32.totalorder %s23, %s26
    %p32 = scmp.eq.s32.totalorder %s13, 0
    %p33 = por %p31, %p32
    %p34 = scmp.ne.s32.totalorder %s23, %s26
    %p35 = scmp.eq.s32.totalorder %s18, 1
    %p36 = por %p34, %p35
    %p37 = scmp.ne.s32.totalorder %s26, %s27
    %p38 = scmp.eq.s32.totalorder %s18, 0
    %p39 = por %p37, %p38
    %p40 = scmp.ne.s32.totalorder %s26, %s27
    %p41 = scmp.eq.s32.totalorder %s19, 1
    %p42 = por %p40, %p41
    %p44 = scmp.ne.s32.totalorder %s27, %s43
    %p45 = scmp.eq.s32.totalorder %s19, 0
    %p46 = por %p44, %p45
    %s48 = sadd.s32 %s47, 1
    %p51 = scmp.eq.s32.totalorder %s13, 1
    %p52 = scmp.ne.s32.totalorder %s47, %s49
    %p53 = scmp.eq.s32.totalorder %s13, 0
    %p54 = por %p52, %p53
    %p55 = scmp.ne.s32.totalorder %s47, %s49
    %p56 = scmp.eq.s32.totalorder %s18, 1
    %p57 = por %p55, %p56
    %p58 = scmp.ne.s32.totalorder %s49, %s50
    %p59 = scmp.eq.s32.totalorder %s18, 0
    %p60 = por %p58, %p59
    %p61 = scmp.ne.s32.totalorder %s49, %s50
    %p62 = scmp.eq.s32.totalorder %s19, 1
    %p63 = por %p61, %p62
    %p65 = scmp.ne.s32.totalorder %s50, %s64
    %p66 = scmp.eq.s32.totalorder %s19, 0
    %p67 = por %p65, %p66
    %s69 = sadd.s32 %s68, 1
    %p72 = scmp.eq.s32.totalorder %s13, 1
    %p73 = scmp.ne.s32.totalorder %s68, %s70
    %p74 = scmp.eq.s32.totalorder %s13, 0
    %p75 = por %p73, %p74
    %p76 = scmp.ne.s32.totalorder %s68, %s70
    %p77 = scmp.eq.s32.totalorder %s18, 1
    %p78 = por %p76, %p77
    %p79 = scmp.ne.s32.totalorder %s70, %s71
    %p80 = scmp.eq.s32.totalorder %s18, 0
    %p81 = por %p79, %p80
    %p82 = scmp.ne.s32.totalorder %s70, %s71
    %p83 = scmp.eq.s32.totalorder %s19, 1
    %p84 = por %p82, %p83
    %p86 = scmp.ne.s32.totalorder %s71, %s85
    %p87 = scmp.eq.s32.totalorder %s19, 0
    %p88 = por %p86, %p87
    %s90 = sadd.s32 %s89, 1
    %p93 = scmp.eq.s32.totalorder %s13, 1
    %p94 = scmp.ne.s32.totalorder %s89, %s91
    %p95 = scmp.eq.s32.totalorder %s13, 0
    %p96 = por %p94, %p95
    %p97 = scmp.ne.s32.totalorder %s89, %s91
    %p98 = scmp.eq.s32.totalorder %s18, 1
    %p99 = por %p97, %p98
    %p100 = scmp.ne.s32.totalorder %s91, %s92
    %p101 = scmp.eq.s32.totalorder %s18, 0
    %p102 = por %p100, %p101
    %p103 = scmp.ne.s32.totalorder %s91, %s92
    %p104 = scmp.eq.s32.totalorder %s19, 1
    %p105 = por %p103, %p104
    %p107 = scmp.ne.s32.totalorder %s92, %s106
    %p108 = scmp.eq.s32.totalorder %s19, 0
    %p109 = por %p107, %p108
    %s111 = sadd.s32 %s110, 1
    %p114 = scmp.eq.s32.totalorder %s13, 1
    %p115 = scmp.ne.s32.totalorder %s110, %s112
    %p116 = scmp.eq.s32.totalorder %s13, 0
    %p117 = por %p115, %p116
    %p118 = scmp.ne.s32.totalorder %s110, %s112
    %p119 = scmp.eq.s32.totalorder %s18, 1
    %p120 = por %p118, %p119
    %p121 = scmp.ne.s32.totalorder %s112, %s113
    %p122 = scmp.eq.s32.totalorder %s18, 0
    %p123 = por %p121, %p122
    %p124 = scmp.ne.s32.totalorder %s112, %s113
    %p125 = scmp.eq.s32.totalorder %s19, 1
    %p126 = por %p124, %p125
    %p128 = scmp.ne.s32.totalorder %s113, %s127
    %p129 = scmp.eq.s32.totalorder %s19, 0
    %p130 = por %p128, %p129
    %s132 = sadd.s32 %s131, 1
    %p135 = scmp.eq.s32.totalorder %s13, 1
    %p136 = scmp.ne.s32.totalorder %s131, %s133
    %p137 = scmp.eq.s32.totalorder %s13, 0
    %p138 = por %p136, %p137
    %p139 = scmp.ne.s32.totalorder %s131, %s133
    %p140 = scmp.eq.s32.totalorder %s18, 1
    %p141 = por %p139, %p140
    %p142 = scmp.ne.s32.totalorder %s133, %s134
    %p143 = scmp.eq.s32.totalorder %s18, 0
    %p144 = por %p142, %p143
    %p145 = scmp.ne.s32.totalorder %s133, %s134
    %p146 = scmp.eq.s32.totalorder %s19, 1
    %p147 = por %p145, %p146
    %p149 = scmp.ne.s32.totalorder %s134, %s148
    %p150 = scmp.eq.s32.totalorder %s19, 0
    %p151 = por %p149, %p150
    %s153 = sadd.s32 %s152, 1
    %p156 = scmp.eq.s32.totalorder %s13, 1
    %p157 = scmp.ne.s32.totalorder %s152, %s154
    %p158 = scmp.eq.s32.totalorder %s13, 0
    %p159 = por %p157, %p158
    %p160 = scmp.ne.s32.totalorder %s152, %s154
    %p161 = scmp.eq.s32.totalorder %s18, 1
    %p162 = por %p160, %p161
    %p163 = scmp.ne.s32.totalorder %s154, %s155
    %p164 = scmp.eq.s32.totalorder %s18, 0
    %p165 = por %p163, %p164
    %p166 = scmp.ne.s32.totalorder %s154, %s155
    %p167 = scmp.eq.s32.totalorder %s19, 1
    %p168 = por %p166, %p167
    %p170 = scmp.ne.s32.totalorder %s155, %s169
    %p171 = scmp.eq.s32.totalorder %s19, 0
    %p172 = por %p170, %p171
    %s173 = ssub.s32 %s13, %s20
    %p174 = scmp.eq.s32.totalorder %s173, 0
    %s176 = sadd.s32 %s175, 1
    %s177 = scalar_select %p174, %s175, %s176
    %p180 = pneg %p174
    %p181 = scmp.eq.s32.totalorder %s13, 1
    %p182 = por %p180, %p181
    %p183 = scmp.ne.s32.totalorder %s175, %s178
    %p184 = scmp.eq.s32.totalorder %s13, 0
    %p185 = por %p183, %p184
    %p186 = scmp.ne.s32.totalorder %s175, %s178
    %p187 = scmp.eq.s32.totalorder %s18, 1
    %p188 = por %p186, %p187
    %p189 = scmp.ne.s32.totalorder %s178, %s179
    %p190 = scmp.eq.s32.totalorder %s18, 0
    %p191 = por %p189, %p190
    %p192 = scmp.ne.s32.totalorder %s178, %s179
    %p193 = scmp.eq.s32.totalorder %s19, 1
    %p194 = por %p192, %p193
    %p196 = scmp.ne.s32.totalorder %s179, %s195
    %p197 = scmp.eq.s32.totalorder %s19, 0
    %p198 = por %p196, %p197
    %p199 = scmp.le.s32.totalorder 1, %s13
    %p200 = scmp.lt.s32.totalorder %s13, 3
    %p201 = pnand %p199, %p200
    %p202 = pneg %p201
    // Predicated region
    $region9: #{variable_length_residual.1} parent=5 // pred_check
      _
    $region10: #{variable_length_residual.1} parent=5 // pred_check_branch
      %204 = sbr.rel (%p201) target = $region12
    $region11: #{variable_length_residual.1} parent=5 // pred_region
      %s205 = ssub.s32 %s13, 1
      // Predicated region
      $region13: #{variable_length_residual.1} parent=11 // pred_check
        %p206 = pneg %p60
      $region14: #{variable_length_residual.1} parent=11 // pred_check_branch
        %208 = sbr.rel (%p206) target = $region16
      $region15: #{variable_length_residual.1} parent=11 // pred_region
        _
      $region16: #{variable_length_residual.1} parent=11 // pred_fallthru
        _
      // Predicated region
      $region17: #{variable_length_residual.1} parent=11 // pred_check
        %p209 = pneg %p81
      $region18: #{variable_length_residual.1} parent=11 // pred_check_branch
        %211 = sbr.rel (%p209) target = $region20
      $region19: #{variable_length_residual.1} parent=11 // pred_region
        _
      $region20: #{variable_length_residual.1} parent=11 // pred_fallthru
        _
      // Predicated region
      $region21: #{variable_length_residual.1} parent=11 // pred_check
        %p212 = pneg %p102
      $region22: #{variable_length_residual.1} parent=11 // pred_check_branch
        %214 = sbr.rel (%p212) target = $region24
      $region23: #{variable_length_residual.1} parent=11 // pred_region
        _
      $region24: #{variable_length_residual.1} parent=11 // pred_fallthru
        _
      // Predicated region
      $region25: #{variable_length_residual.1} parent=11 // pred_check
        %p215 = pneg %p123
      $region26: #{variable_length_residual.1} parent=11 // pred_check_branch
        %217 = sbr.rel (%p215) target = $region28
      $region27: #{variable_length_residual.1} parent=11 // pred_region
        _
      $region28: #{variable_length_residual.1} parent=11 // pred_fallthru
        _
      // Predicated region
      $region29: #{variable_length_residual.1} parent=11 // pred_check
        %p218 = pneg %p144
      $region30: #{variable_length_residual.1} parent=11 // pred_check_branch
        %220 = sbr.rel (%p218) target = $region32
      $region31: #{variable_length_residual.1} parent=11 // pred_region
        _
      $region32: #{variable_length_residual.1} parent=11 // pred_fallthru
        _
      // Predicated region
      $region33: #{variable_length_residual.1} parent=11 // pred_check
        %p221 = pneg %p165
      $region34: #{variable_length_residual.1} parent=11 // pred_check_branch
        %223 = sbr.rel (%p221) target = $region36
      $region35: #{variable_length_residual.1} parent=11 // pred_region
        _
      $region36: #{variable_length_residual.1} parent=11 // pred_fallthru
        _
    $region12: #{variable_length_residual.1} parent=5 // pred_fallthru
      _
    %p224 = scmp.lt.s32.totalorder %s13, 2
    // Predicated region
    $region37: #{variable_length_residual.1} parent=5 // pred_check
      %p225 = pneg %p224
    $region38: #{variable_length_residual.1} parent=5 // pred_check_branch
      %227 = sbr.rel (%p225) target = $region40
    $region39: #{variable_length_residual.1} parent=5 // pred_region
      // Predicated region
      $region41: #{variable_length_residual.1} parent=39 // pred_check
        %p228 = pneg %p33
      $region42: #{variable_length_residual.1} parent=39 // pred_check_branch
        %230 = sbr.rel (%p228) target = $region44
      $region43: #{variable_length_residual.1} parent=39 // pred_region
        %s231 = smul.u32 2, %s13
        %p232 = scmp.lt.s32.totalorder %s231, 3
        %s233 = scalar_select %p232, %s231, 3
        %s234 = smul.addr %s233, 4
        %s235 = smul.addr %s234, 8
        %s236 = scalar_lea.vmem %s0, %s235
        %s237 = smul.u32 2, %s13
      $region44: #{variable_length_residual.1} parent=39 // pred_fallthru
        _
    $region40: #{variable_length_residual.1} parent=5 // pred_fallthru
      _
    %p238 = scmp.le.s32.totalorder 1, %s13
    %p239 = scmp.lt.s32.totalorder %s13, 3
    %p240 = pnand %p238, %p239
    %p241 = pneg %p240
    // Predicated region
    $region45: #{variable_length_residual.1} parent=5 // pred_check
      _
    $region46: #{variable_length_residual.1} parent=5 // pred_check_branch
      %243 = sbr.rel (%p240) target = $region48
    $region47: #{variable_length_residual.1} parent=5 // pred_region
      %s244 = ssub.s32 %s13, 1
      %s245 = smul.u32 2, %s18
      %p246 = scmp.lt.s32.totalorder %s245, 3
      %s247 = scalar_select %p246, %s245, 3
      %s248 = smul.addr %s247, 4
      %s249 = smul.addr %s248, 8
      %s250 = scalar_lea.vmem %s0, %s249
      %p251 = pneg %p39
      %p252 = pneg %p36
      %p253 = pneg %p60
      %p254 = pneg %p57
      %p255 = pneg %p81
      %p256 = pneg %p78
      %p257 = pneg %p102
      %p258 = pneg %p99
      %p259 = pneg %p123
      %p260 = pneg %p120
      %p261 = pneg %p144
      %p262 = pneg %p141
      %p263 = pneg %p165
      %p264 = pneg %p162
      %p265 = pneg %p191
      %p266 = pneg %p188
      %s267 = smul.u32 2, %s18
      %p268 = scmp.lt.s32.totalorder %s267, 3
      %s269 = scalar_select %p268, %s267, 3
      %s270 = smul.addr %s269, 2
      %s271 = smul.addr %s270, 8
      %s272 = scalar_lea.vmem %s7, %s271
      %s273 = smul.u32 2, %s18
      %p274 = scmp.lt.s32.totalorder %s273, 3
      %s275 = scalar_select %p274, %s273, 3
      %s276 = smul.addr %s275, 4
      %s277 = smul.addr %s276, 8
      %s278 = scalar_lea.vmem %s0, %s277
      %s279 = smul.u32 2, %s18
      %s280 = smul.u32 2, %s18
      %p281 = scmp.lt.s32.totalorder %s280, 3
      %s282 = scalar_select %p281, %s280, 3
      %s283 = smul.addr %s282, 2
      %s284 = smul.addr %s283, 8
      %s285 = scalar_lea.vmem %s7, %s284
      %s286 = smul.u32 2, %s18
      %v287 = vld [vmem:[%s278] sm:$0xff]
      %v288 = vld [vmem:[%s278 + $0x8] sm:$0xff]
      %v289 = vld [vmem:[%s278 + $0x10] sm:$0xff]
      %v290 = vld [vmem:[%s278 + $0x18] sm:$0xff]
      %v291 = vld [vmem:[%s278 + $0x20] sm:$0xff]
      %v292 = vld [vmem:[%s278 + $0x28] sm:$0xff]
      %v293 = vld [vmem:[%s278 + $0x30] sm:$0xff]
      %v294 = vld [vmem:[%s278 + $0x38] sm:$0xff]
      %v295 = vadd.f32 %v287, %v288
      %v296 = vadd.f32 %v295, %v289
      %v297 = vadd.f32 %v296, %v290
      %v298 = vrot.slane %v297, 4
      %v299 = vadd.f32 %v297, %v298
      %v300 = vrot.slane %v299, 2
      %v301 = vadd.f32 %v299, %v300
      %v302 = vrot.slane %v301, 1
      %v303 = vadd.f32 %v301, %v302
      %v304 = vadd.f32 %v291, %v292
      %v305 = vadd.f32 %v304, %v293
      %v306 = vadd.f32 %v305, %v294
      %v307 = vrot.slane %v306, 4
      %v308 = vadd.f32 %v306, %v307
      %v309 = vrot.slane %v308, 2
      %v310 = vadd.f32 %v308, %v309
      %v311 = vrot.slane %v310, 1
      %v312 = vadd.f32 %v310, %v311
      %v313 = vmul.f32 %v287, %v287
      %v314 = vmul.f32 %v288, %v288
      %v315 = vmul.f32 %v289, %v289
      %v316 = vmul.f32 %v290, %v290
      %v317 = vmul.f32 %v291, %v291
      %v318 = vmul.f32 %v292, %v292
      %v319 = vmul.f32 %v293, %v293
      %v320 = vmul.f32 %v294, %v294
      %v321 = vadd.f32 %v313, %v314
      %v322 = vadd.f32 %v321, %v315
      %v323 = vadd.f32 %v322, %v316
      %v324 = vrot.slane %v323, 4
      %v325 = vadd.f32 %v323, %v324
      %v326 = vrot.slane %v325, 2
      %v327 = vadd.f32 %v325, %v326
      %v328 = vrot.slane %v327, 1
      %v329 = vadd.f32 %v327, %v328
      %v330 = vadd.f32 %v317, %v318
      %v331 = vadd.f32 %v330, %v319
      %v332 = vadd.f32 %v331, %v320
      %v333 = vrot.slane %v332, 4
      %v334 = vadd.f32 %v332, %v333
      %v335 = vrot.slane %v334, 2
      %v336 = vadd.f32 %v334, %v335
      %v337 = vrot.slane %v336, 1
      %v338 = vadd.f32 %v336, %v337
      %vm341 = vcmask 1041409
      %v342 = vsel %vm341, %v312, %v303
      %vm346 = vcmask 1043459
      %v347 = vsel %vm346, %v338, %v329
      %vm349 = vcmask 1041408
      %v350 = vsel %vm349, %v342, %v347
      %v351 = vld [vmem:[%s1] sm:$0xff]
      %v352 = vld [vmem:[%s1 + $0x8] sm:$0xff]
      %v353 = vld [vmem:[%s1 + $0x10] sm:$0xff]
      %v354 = vld [vmem:[%s1 + $0x18] sm:$0xff]
      %v355 = vld [vmem:[%s1 + $0x20] sm:$0xff]
      %v356 = vld [vmem:[%s1 + $0x28] sm:$0xff]
      %v357 = vld [vmem:[%s1 + $0x30] sm:$0xff]
      %v358 = vld [vmem:[%s1 + $0x38] sm:$0xff]
      %v359 = vld [vmem:[%s1 + $0x40] sm:$0xff]
      %v360 = vld [vmem:[%s1 + $0x48] sm:$0xff]
      %v361 = vld [vmem:[%s1 + $0x50] sm:$0xff]
      %v362 = vld [vmem:[%s1 + $0x58] sm:$0xff]
      %v363 = vld [vmem:[%s1 + $0x60] sm:$0xff]
      %v364 = vld [vmem:[%s1 + $0x68] sm:$0xff]
      %v365 = vld [vmem:[%s1 + $0x70] sm:$0xff]
      %v366 = vld [vmem:[%s1 + $0x78] sm:$0xff]
      %367 = vmatprep.subr.mxu0 0.0
      %368 = vmatpush1.msra.mxu0 %v351
      %369 = vmatprep.subr.mxu0 0.0
      %370 = vmatpush1.msra.mxu0 %v352
      %371 = vmatprep.subr.mxu0 0.0
      %372 = vmatpush1.msra.mxu0 %v353
      %373 = vmatprep.subr.mxu0 0.0
      %374 = vmatpush1.msra.mxu0 %v354
      %375 = vmatprep.subr.mxu0 0.0
      %376 = vmatpush1.msra.mxu0 %v355
      %377 = vmatprep.subr.mxu0 0.0
      %378 = vmatpush1.msra.mxu0 %v356
      %379 = vmatprep.subr.mxu0 0.0
      %380 = vmatpush1.msra.mxu0 %v357
      %381 = vmatprep.subr.mxu0 0.0
      %382 = vmatpush1.msra.mxu0 %v358
      %383 = vmatprep.subr.mxu0 0.0
      %384 = vmatpush1.msra.mxu0 %v359
      %385 = vmatprep.subr.mxu0 0.0
      %386 = vmatpush1.msra.mxu0 %v360
      %387 = vmatprep.subr.mxu0 0.0
      %388 = vmatpush1.msra.mxu0 %v361
      %389 = vmatprep.subr.mxu0 0.0
      %390 = vmatpush1.msra.mxu0 %v362
      %391 = vmatprep.subr.mxu0 0.0
      %392 = vmatpush1.msra.mxu0 %v363
      %393 = vmatprep.subr.mxu0 0.0
      %394 = vmatpush1.msra.mxu0 %v364
      %395 = vmatprep.subr.mxu0 0.0
      %396 = vmatpush1.msra.mxu0 %v365
      %397 = vmatprep.subr.mxu0 0.0
      %398 = vmatpush1.msra.mxu0 %v366
      %399 = vmatprep.subr.mxu0 0.0
      %400 = vmatpush1.msra.mxu0 0.0
      %401 = vmatprep.subr.mxu0 0.0
      %402 = vmatpush1.msra.mxu0 0.0
      %403 = vmatprep.subr.mxu0 0.0
      %404 = vmatpush1.msra.mxu0 0.0
      %405 = vmatprep.subr.mxu0 0.0
      %406 = vmatpush1.msra.mxu0 0.0
      %407 = vmatprep.subr.mxu0 0.0
      %408 = vmatpush1.msra.mxu0 0.0
      %409 = vmatprep.subr.mxu0 0.0
      %410 = vmatpush1.msra.mxu0 0.0
      %411 = vmatprep.subr.mxu0 0.0
      %412 = vmatpush1.msra.mxu0 0.0
      %413 = vmatprep.subr.mxu0 0.0
      %414 = vmatpush1.msra.mxu0 0.0
      %415 = vmatprep.subr.mxu0 0.0
      %416 = vmatpush1.msra.mxu0 0.0
      %417 = vmatprep.subr.mxu0 0.0
      %418 = vmatpush1.msra.mxu0 0.0
      %419 = vmatprep.subr.mxu0 0.0
      %420 = vmatpush1.msra.mxu0 0.0
      %421 = vmatprep.subr.mxu0 0.0
      %422 = vmatpush1.msra.mxu0 0.0
      %423 = vmatprep.subr.mxu0 0.0
      %424 = vmatpush1.msra.mxu0 0.0
      %425 = vmatprep.subr.mxu0 0.0
      %426 = vmatpush1.msra.mxu0 0.0
      %427 = vmatprep.subr.mxu0 0.0
      %428 = vmatpush1.msra.mxu0 0.0
      %429 = vmatprep.subr.mxu0 0.0
      %430 = vmatpush1.msra.mxu0 0.0
      %431 = vmatprep.mubr.f32.mxu0 0.0
      %432 = vmatmul.mubr.f32.gmra.mrb[0].mxu0 %v350
      %v433 = vpop.f32.mrb[0].mxu0
      %v434 = vadd.f32 0.0, %v433
      %v435 = vpop.f32.mrb[0].mxu0
      %436 = vdwg.mxu0
      %v437 = vmul.f32 %v434, %v434
      %v439 = vrot.slane %v437, 6
      %v441 = vsub.f32 %v434, %v439
      %v442 = vadd.f32 %v441, 1e-05
      %v443 = vrsqrt.pop %v442
      %v446 = vunpack.c.l.s4 1966171168
      %v447 = vunpack.c.0.s8 %v446
      %v448 = vlaneseq
      %v449 = vshrl.u32 %v448, 7
      %v450 = vsub.s32 %v447, %v449
      %v451 = vrot.slane %v434, %v450
      %v452 = vcombine.high %v451, %v451
      %v454 = vunpack.c.l.s4 1966171168
      %v455 = vunpack.c.0.s8 %v454
      %v456 = vlaneseq
      %v457 = vshrl.u32 %v456, 7
      %v458 = vsub.s32 %v455, %v457
      %v459 = vrot.slane %v451, %v458
      %v461 = vunpack.c.l.s4 1966171168
      %v462 = vunpack.c.0.s8 %v461
      %v463 = vlaneseq
      %v464 = vshrl.u32 %v463, 7
      %v465 = vsub.s32 %v462, %v464
      %v466 = vrot.slane %v452, %v465
      %v467 = vlaneseq
      %v468 = vshrl.u32 %v467, 7
      %v469 = vsub.s32 0, %v468
      %v470 = vrot.slane %v459, %v469
      %v471 = vlaneseq
      %v472 = vshrl.u32 %v471, 7
      %v473 = vsub.s32 0, %v472
      %v474 = vrot.slane %v466, %v473
      %v477 = vsub.f32 %v287, %v470
      %v478 = vsub.f32 %v288, %v470
      %v479 = vsub.f32 %v289, %v470
      %v480 = vsub.f32 %v290, %v470
      %v481 = vsub.f32 %v291, %v474
      %v482 = vsub.f32 %v292, %v474
      %v483 = vsub.f32 %v293, %v474
      %v484 = vsub.f32 %v294, %v474
      %v487 = vunpack.c.l.s4 1966171168
      %v488 = vunpack.c.0.s8 %v487
      %v489 = vlaneseq
      %v490 = vshrl.u32 %v489, 7
      %v491 = vsub.s32 %v488, %v490
      %v492 = vrot.slane %v443, %v491
      %v493 = vcombine.high %v492, %v492
      %v495 = vunpack.c.l.s4 1966171168
      %v496 = vunpack.c.0.s8 %v495
      %v497 = vlaneseq
      %v498 = vshrl.u32 %v497, 7
      %v499 = vsub.s32 %v496, %v498
      %v500 = vrot.slane %v492, %v499
      %v502 = vunpack.c.l.s4 1966171168
      %v503 = vunpack.c.0.s8 %v502
      %v504 = vlaneseq
      %v505 = vshrl.u32 %v504, 7
      %v506 = vsub.s32 %v503, %v505
      %v507 = vrot.slane %v493, %v506
      %v508 = vcombine.high %v500, %v500
      %v509 = vcombine.high %v507, %v507
      %v510 = vlaneseq
      %v511 = vshrl.u32 %v510, 7
      %v512 = vsub.s32 0, %v511
      %v513 = vrot.slane %v508, %v512
      %v514 = vlaneseq
      %v515 = vshrl.u32 %v514, 7
      %v516 = vsub.s32 0, %v515
      %v517 = vrot.slane %v509, %v516
      %v520 = vmul.f32 %v477, %v513
      %v521 = vmul.f32 %v478, %v513
      %v522 = vmul.f32 %v479, %v513
      %v523 = vmul.f32 %v480, %v513
      %v524 = vmul.f32 %v481, %v517
      %v525 = vmul.f32 %v482, %v517
      %v526 = vmul.f32 %v483, %v517
      %v527 = vmul.f32 %v484, %v517
      %v528 = vld [vmem:[%s2] sm:$0xff]
      %v529 = vld [vmem:[%s2 + $0x8] sm:$0xff]
      %v530 = vld [vmem:[%s2 + $0x10] sm:$0xff]
      %v531 = vld [vmem:[%s2 + $0x18] sm:$0xff]
      %v532 = vld [vmem:[%s2 + $0x20] sm:$0xff]
      %v533 = vld [vmem:[%s2 + $0x28] sm:$0xff]
      %v534 = vld [vmem:[%s2 + $0x30] sm:$0xff]
      %v535 = vld [vmem:[%s2 + $0x38] sm:$0xff]
      %v536 = vld [vmem:[%s2 + $0x40] sm:$0xff]
      %v537 = vld [vmem:[%s2 + $0x48] sm:$0xff]
      %v538 = vld [vmem:[%s2 + $0x50] sm:$0xff]
      %v539 = vld [vmem:[%s2 + $0x58] sm:$0xff]
      %v540 = vld [vmem:[%s2 + $0x60] sm:$0xff]
      %v541 = vld [vmem:[%s2 + $0x68] sm:$0xff]
      %v542 = vld [vmem:[%s2 + $0x70] sm:$0xff]
      %v543 = vld [vmem:[%s2 + $0x78] sm:$0xff]
      %v544 = vld [vmem:[%s3] sm:$0x1]
      %v546 = vlaneseq
      %v547 = vshrl.u32 %v546, 7
      %v548 = vsub.s32 0, %v547
      %v549 = vrot.slane %v544, %v548
      %551 = vmatprep.subr.mxu0 0.0
      %552 = vmatpush1.msra.mxu0 %v528
      %553 = vmatprep.subr.mxu0 0.0
      %554 = vmatpush1.msra.mxu0 %v529
      %555 = vmatprep.subr.mxu0 0.0
      %556 = vmatpush1.msra.mxu0 %v530
      %557 = vmatprep.subr.mxu0 0.0
      %558 = vmatpush1.msra.mxu0 %v531
      %559 = vmatprep.subr.mxu0 0.0
      %560 = vmatpush1.msra.mxu0 %v532
      %561 = vmatprep.subr.mxu0 0.0
      %562 = vmatpush1.msra.mxu0 %v533
      %563 = vmatprep.subr.mxu0 0.0
      %564 = vmatpush1.msra.mxu0 %v534
      %565 = vmatprep.subr.mxu0 0.0
      %566 = vmatpush1.msra.mxu0 %v535
      %567 = vmatprep.subr.mxu0 0.0
      %568 = vmatpush1.msra.mxu0 %v536
      %569 = vmatprep.subr.mxu0 0.0
      %570 = vmatpush1.msra.mxu0 %v537
      %571 = vmatprep.subr.mxu0 0.0
      %572 = vmatpush1.msra.mxu0 %v538
      %573 = vmatprep.subr.mxu0 0.0
      %574 = vmatpush1.msra.mxu0 %v539
      %575 = vmatprep.subr.mxu0 0.0
      %576 = vmatpush1.msra.mxu0 %v540
      %577 = vmatprep.subr.mxu0 0.0
      %578 = vmatpush1.msra.mxu0 %v541
      %579 = vmatprep.subr.mxu0 0.0
      %580 = vmatpush1.msra.mxu0 %v542
      %581 = vmatprep.subr.mxu0 0.0
      %582 = vmatpush1.msra.mxu0 %v543
      %583 = vmatprep.subr.mxu0 0.0
      %584 = vmatpush1.msra.mxu0 0.0
      %585 = vmatprep.subr.mxu0 0.0
      %586 = vmatpush1.msra.mxu0 0.0
      %587 = vmatprep.subr.mxu0 0.0
      %588 = vmatpush1.msra.mxu0 0.0
      %589 = vmatprep.subr.mxu0 0.0
      %590 = vmatpush1.msra.mxu0 0.0
      %591 = vmatprep.subr.mxu0 0.0
      %592 = vmatpush1.msra.mxu0 0.0
      %593 = vmatprep.subr.mxu0 0.0
      %594 = vmatpush1.msra.mxu0 0.0
      %595 = vmatprep.subr.mxu0 0.0
      %596 = vmatpush1.msra.mxu0 0.0
      %597 = vmatprep.subr.mxu0 0.0
      %598 = vmatpush1.msra.mxu0 0.0
      %599 = vmatprep.subr.mxu0 0.0
      %600 = vmatpush1.msra.mxu0 0.0
      %601 = vmatprep.subr.mxu0 0.0
      %602 = vmatpush1.msra.mxu0 0.0
      %603 = vmatprep.subr.mxu0 0.0
      %604 = vmatpush1.msra.mxu0 0.0
      %605 = vmatprep.subr.mxu0 0.0
      %606 = vmatpush1.msra.mxu0 0.0
      %607 = vmatprep.subr.mxu0 0.0
      %608 = vmatpush1.msra.mxu0 0.0
      %609 = vmatprep.subr.mxu0 0.0
      %610 = vmatpush1.msra.mxu0 0.0
      %611 = vmatprep.subr.mxu0 0.0
      %612 = vmatpush1.msra.mxu0 0.0
      %613 = vmatprep.subr.mxu0 0.0
      %614 = vmatpush1.msra.mxu0 0.0
      %615 = vmatprep.mubr.f32.mxu0 0.0
      %616 = vmatmul.mubr.f32.gmra.mrb[0].mxu0 %v520
      %v617 = vpop.f32.mrb[0].mxu0
      %v618 = vadd.f32 %v549, %v617
      %v619 = vpop.f32.mrb[0].mxu0
      %620 = vmatprep.mubr.f32.mxu0 0.0
      %621 = vmatmul.mubr.f32.gmra.mrb[0].mxu0 %v521
      %v622 = vpop.f32.mrb[0].mxu0
      %v623 = vadd.f32 %v549, %v622
      %v624 = vpop.f32.mrb[0].mxu0
      %625 = vmatprep.mubr.f32.mxu0 0.0
      %626 = vmatmul.mubr.f32.gmra.mrb[0].mxu0 %v522
      %v627 = vpop.f32.mrb[0].mxu0
      %v628 = vadd.f32 %v549, %v627
      %v629 = vpop.f32.mrb[0].mxu0
      %630 = vmatprep.mubr.f32.mxu0 0.0
      %631 = vmatmul.mubr.f32.gmra.mrb[0].mxu0 %v523
      %v632 = vpop.f32.mrb[0].mxu0
      %v633 = vadd.f32 %v549, %v632
      %v634 = vpop.f32.mrb[0].mxu0
      %635 = vmatprep.mubr.f32.mxu0 0.0
      %636 = vmatmul.mubr.f32.gmra.mrb[0].mxu0 %v524
      %v637 = vpop.f32.mrb[0].mxu0
      %v638 = vadd.f32 %v549, %v637
      %v639 = vpop.f32.mrb[0].mxu0
      %640 = vmatprep.mubr.f32.mxu0 0.0
      %641 = vmatmul.mubr.f32.gmra.mrb[0].mxu0 %v525
      %v642 = vpop.f32.mrb[0].mxu0
      %v643 = vadd.f32 %v549, %v642
      %v644 = vpop.f32.mrb[0].mxu0
      %645 = vmatprep.mubr.f32.mxu0 0.0
      %646 = vmatmul.mubr.f32.gmra.mrb[0].mxu0 %v526
      %v647 = vpop.f32.mrb[0].mxu0
      %v648 = vadd.f32 %v549, %v647
      %v649 = vpop.f32.mrb[0].mxu0
      %650 = vmatprep.mubr.f32.mxu0 0.0
      %651 = vmatmul.mubr.f32.gmra.mrb[0].mxu0 %v527
      %v652 = vpop.f32.mrb[0].mxu0
      %v653 = vadd.f32 %v549, %v652
      %v654 = vpop.f32.mrb[0].mxu0
      %655 = vdwg.mxu0
      %v656 = vxor.u32 %v618, 2147483648
      %v657 = vxor.u32 %v623, 2147483648
      %v658 = vxor.u32 %v628, 2147483648
      %v659 = vxor.u32 %v633, 2147483648
      %v660 = vxor.u32 %v638, 2147483648
      %v661 = vxor.u32 %v643, 2147483648
      %v662 = vxor.u32 %v648, 2147483648
      %v663 = vxor.u32 %v653, 2147483648
      %v664 = vmul.f32 %v656, 1.442695
      %v665 = vpow.pop %v664
      %v666 = vmul.f32 %v657, 1.442695
      %v667 = vpow.pop %v666
      %v668 = vmul.f32 %v658, 1.442695
      %v669 = vpow.pop %v668
      %v670 = vmul.f32 %v659, 1.442695
      %v671 = vpow.pop %v670
      %v672 = vmul.f32 %v660, 1.442695
      %v673 = vpow.pop %v672
      %v674 = vmul.f32 %v661, 1.442695
      %v675 = vpow.pop %v674
      %v676 = vmul.f32 %v662, 1.442695
      %v677 = vpow.pop %v676
      %v678 = vmul.f32 %v663, 1.442695
      %v679 = vpow.pop %v678
      %v680 = vadd.f32 %v665, 1.0
      %v681 = vadd.f32 %v667, 1.0
      %v682 = vadd.f32 %v669, 1.0
      %v683 = vadd.f32 %v671, 1.0
      %v684 = vadd.f32 %v673, 1.0
      %v685 = vadd.f32 %v675, 1.0
      %v686 = vadd.f32 %v677, 1.0
      %v687 = vadd.f32 %v679, 1.0
      %v688 = vrcp.pop %v680
      %v689 = vmul.f32 1.0, %v688
      %v690 = vrcp.pop %v681
      %v691 = vmul.f32 1.0, %v690
      %v692 = vrcp.pop %v682
      %v693 = vmul.f32 1.0, %v692
      %v694 = vrcp.pop %v683
      %v695 = vmul.f32 1.0, %v694
      %v696 = vrcp.pop %v684
      %v697 = vmul.f32 1.0, %v696
      %v698 = vrcp.pop %v685
      %v699 = vmul.f32 1.0, %v698
      %v700 = vrcp.pop %v686
      %v701 = vmul.f32 1.0, %v700
      %v702 = vrcp.pop %v687
      %v703 = vmul.f32 1.0, %v702
      %v704 = vmul.f32 %v618, %v689
      %v705 = vmul.f32 %v623, %v691
      %v706 = vmul.f32 %v628, %v693
      %v707 = vmul.f32 %v633, %v695
      %v708 = vmul.f32 %v638, %v697
      %v709 = vmul.f32 %v643, %v699
      %v710 = vmul.f32 %v648, %v701
      %v711 = vmul.f32 %v653, %v703
      %v712 = vld [vmem:[%s6] sm:$0xff]
      %v713 = vld [vmem:[%s6 + $0x8] sm:$0xff]
      %v714 = vld [vmem:[%s6 + $0x10] sm:$0xff]
      %v715 = vld [vmem:[%s6 + $0x18] sm:$0xff]
      %vm716 = vcmask 523264
      %v718 = vsel %vm716, %v712, 0
      %v721 = vsel %vm716, %v713, 0
      %v724 = vsel %vm716, %v714, 0
      %v727 = vsel %vm716, %v715, 0
      %729 = vmatprep.subr.mxu0 0.0
      %730 = vmatpush1.msra.mxu0 %v287
      %731 = vmatprep.subr.mxu0 0.0
      %732 = vmatpush1.msra.mxu0 %v288
      %733 = vmatprep.subr.mxu0 0.0
      %734 = vmatpush1.msra.mxu0 %v289
      %735 = vmatprep.subr.mxu0 0.0
      %736 = vmatpush1.msra.mxu0 %v290
      %737 = vmatprep.subr.mxu0 0.0
      %738 = vmatpush1.msra.mxu0 %v291
      %739 = vmatprep.subr.mxu0 0.0
      %740 = vmatpush1.msra.mxu0 %v292
      %741 = vmatprep.subr.mxu0 0.0
      %742 = vmatpush1.msra.mxu0 %v293
      %743 = vmatprep.subr.mxu0 0.0
      %744 = vmatpush1.msra.mxu0 %v294
      %745 = vmatprep.subr.mxu0 0.0
      %746 = vmatpush1.msra.mxu0 0.0
      %747 = vmatprep.subr.mxu0 0.0
      %748 = vmatpush1.msra.mxu0 0.0
      %749 = vmatprep.subr.mxu0 0.0
      %750 = vmatpush1.msra.mxu0 0.0
      %751 = vmatprep.subr.mxu0 0.0
      %752 = vmatpush1.msra.mxu0 0.0
      %753 = vmatprep.subr.mxu0 0.0
      %754 = vmatpush1.msra.mxu0 0.0
      %755 = vmatprep.subr.mxu0 0.0
      %756 = vmatpush1.msra.mxu0 0.0
      %757 = vmatprep.subr.mxu0 0.0
      %758 = vmatpush1.msra.mxu0 0.0
      %759 = vmatprep.subr.mxu0 0.0
      %760 = vmatpush1.msra.mxu0 0.0
      %761 = vmatprep.subr.mxu0 0.0
      %762 = vmatpush1.msra.mxu0 0.0
      %763 = vmatprep.subr.mxu0 0.0
      %764 = vmatpush1.msra.mxu0 0.0
      %765 = vmatprep.subr.mxu0 0.0
      %766 = vmatpush1.msra.mxu0 0.0
      %767 = vmatprep.subr.mxu0 0.0
      %768 = vmatpush1.msra.mxu0 0.0
      %769 = vmatprep.subr.mxu0 0.0
      %770 = vmatpush1.msra.mxu0 0.0
      %771 = vmatprep.subr.mxu0 0.0
      %772 = vmatpush1.msra.mxu0 0.0
      %773 = vmatprep.subr.mxu0 0.0
      %774 = vmatpush1.msra.mxu0 0.0
      %775 = vmatprep.subr.mxu0 0.0
      %776 = vmatpush1.msra.mxu0 0.0
      %777 = vmatprep.subr.mxu0 0.0
      %778 = vmatpush1.msra.mxu0 0.0
      %779 = vmatprep.subr.mxu0 0.0
      %780 = vmatpush1.msra.mxu0 0.0
      %781 = vmatprep.subr.mxu0 0.0
      %782 = vmatpush1.msra.mxu0 0.0
      %783 = vmatprep.subr.mxu0 0.0
      %784 = vmatpush1.msra.mxu0 0.0
      %785 = vmatprep.subr.mxu0 0.0
      %786 = vmatpush1.msra.mxu0 0.0
      %787 = vmatprep.subr.mxu0 0.0
      %788 = vmatpush1.msra.mxu0 0.0
      %789 = vmatprep.subr.mxu0 0.0
      %790 = vmatpush1.msra.mxu0 0.0
      %791 = vmatprep.subr.mxu0 0.0
      %792 = vmatpush1.msra.mxu0 0.0
      %793 = vmatprep.mubr.f32.mxu0 0.0
      %794 = vmatmul.mubr.f32.gmra.mrb[0].mxu0 %v718
      %v795 = vpop.f32.mrb[0].mxu0
      %v796 = vadd.f32 0.0, %v795
      %v797 = vpop.f32.mrb[0].mxu0
      %798 = vmatprep.mubr.f32.mxu0 0.0
      %799 = vmatmul.mubr.f32.gmra.mrb[0].mxu0 %v721
      %v800 = vpop.f32.mrb[0].mxu0
      %v801 = vadd.f32 0.0, %v800
      %v802 = vpop.f32.mrb[0].mxu0
      %803 = vmatprep.mubr.f32.mxu0 0.0
      %804 = vmatmul.mubr.f32.gmra.mrb[0].mxu0 %v724
      %v805 = vpop.f32.mrb[0].mxu0
      %v806 = vadd.f32 0.0, %v805
      %v807 = vpop.f32.mrb[0].mxu0
      %808 = vmatprep.mubr.f32.mxu0 0.0
      %809 = vmatmul.mubr.f32.gmra.mrb[0].mxu0 %v727
      %v810 = vpop.f32.mrb[0].mxu0
      %v811 = vadd.f32 0.0, %v810
      %v812 = vpop.f32.mrb[0].mxu0
      %813 = vdwg.mxu0
      %v814 = vld [vmem:[%s4] sm:$0x7f]
      %v815 = vld [vmem:[%s5] sm:$0x1]
      %v817 = vlaneseq
      %v818 = vshrl.u32 %v817, 7
      %v819 = vsub.s32 0, %v818
      %v820 = vrot.slane %v815, %v819
      %822 = vst [vmem:[#allocation2] sm:$0x1] 0.0
      %823 = vst [vmem:[#allocation2 + $0x1] sm:$0xff] %v704
      %824 = vst [vmem:[#allocation2 + $0x9] sm:$0xff] %v705
      %825 = vst [vmem:[#allocation2 + $0x11] sm:$0xff] %v706
      %826 = vst [vmem:[#allocation2 + $0x19] sm:$0xff] %v707
      %827 = vst [vmem:[#allocation2 + $0x21] sm:$0x7f] 0.0
      %v828 = vld [vmem:[#allocation2] ss:$2 sm:$0xff]
      %s829 = scalar_lea.vmem [#allocation2], 16
      %v830 = vld [vmem:[%s829] ss:$2 sm:$0xff]
      %v831 = vlaneseq
      %v832 = vshrl.u32 %v831, 7
      %v833 = vsub.s32 0, %v832
      %v834 = vrot.slane %v814, %v833
      %v835 = vmul.f32 %v828, %v834
      %v836 = vmul.f32 %v830, %v834
      %v837 = vadd.f32 %v820, %v835
      %v838 = vadd.f32 %v820, %v836
      %s839 = scalar_lea.vmem [#allocation2], 1
      %v840 = vld [vmem:[%s839] ss:$2 sm:$0xff]
      %s841 = scalar_lea.vmem [#allocation2], 17
      %v842 = vld [vmem:[%s841] ss:$2 sm:$0xff]
      %v843 = vlaneseq
      %v844 = vshrl.u32 %v843, 7
      %v845 = vsub.s32 1, %v844
      %v846 = vrot.slane %v814, %v845
      %v847 = vmul.f32 %v840, %v846
      %v848 = vmul.f32 %v842, %v846
      %v849 = vadd.f32 %v837, %v847
      %v850 = vadd.f32 %v838, %v848
      %s851 = scalar_lea.vmem [#allocation2], 2
      %v852 = vld [vmem:[%s851] ss:$2 sm:$0xff]
      %s853 = scalar_lea.vmem [#allocation2], 18
      %v854 = vld [vmem:[%s853] ss:$2 sm:$0xff]
      %v855 = vlaneseq
      %v856 = vshrl.u32 %v855, 7
      %v857 = vsub.s32 2, %v856
      %v858 = vrot.slane %v814, %v857
      %v859 = vmul.f32 %v852, %v858
      %v860 = vmul.f32 %v854, %v858
      %v861 = vadd.f32 %v849, %v859
      %v862 = vadd.f32 %v850, %v860
      %s863 = scalar_lea.vmem [#allocation2], 3
      %v864 = vld [vmem:[%s863] ss:$2 sm:$0xff]
      %s865 = scalar_lea.vmem [#allocation2], 19
      %v866 = vld [vmem:[%s865] ss:$2 sm:$0xff]
      %v867 = vlaneseq
      %v868 = vshrl.u32 %v867, 7
      %v869 = vsub.s32 3, %v868
      %v870 = vrot.slane %v814, %v869
      %v871 = vmul.f32 %v864, %v870
      %v872 = vmul.f32 %v866, %v870
      %v873 = vadd.f32 %v861, %v871
      %v874 = vadd.f32 %v862, %v872
      %s875 = scalar_lea.vmem [#allocation2], 4
      %v876 = vld [vmem:[%s875] ss:$2 sm:$0xff]
      %s877 = scalar_lea.vmem [#allocation2], 20
      %v878 = vld [vmem:[%s877] ss:$2 sm:$0xff]
      %v879 = vlaneseq
      %v880 = vshrl.u32 %v879, 7
      %v881 = vsub.s32 4, %v880
      %v882 = vrot.slane %v814, %v881
      %v883 = vmul.f32 %v876, %v882
      %v884 = vmul.f32 %v878, %v882
      %v885 = vadd.f32 %v873, %v883
      %v886 = vadd.f32 %v874, %v884
      %s887 = scalar_lea.vmem [#allocation2], 5
      %v888 = vld [vmem:[%s887] ss:$2 sm:$0xff]
      %s889 = scalar_lea.vmem [#allocation2], 21
      %v890 = vld [vmem:[%s889] ss:$2 sm:$0xff]
      %v891 = vlaneseq
      %v892 = vshrl.u32 %v891, 7
      %v893 = vsub.s32 5, %v892
      %v894 = vrot.slane %v814, %v893
      %v895 = vmul.f32 %v888, %v894
      %v896 = vmul.f32 %v890, %v894
      %v897 = vadd.f32 %v885, %v895
      %v898 = vadd.f32 %v886, %v896
      %s899 = scalar_lea.vmem [#allocation2], 6
      %v900 = vld [vmem:[%s899] ss:$2 sm:$0xff]
      %s901 = scalar_lea.vmem [#allocation2], 22
      %v902 = vld [vmem:[%s901] ss:$2 sm:$0xff]
      %v903 = vlaneseq
      %v904 = vshrl.u32 %v903, 7
      %v905 = vsub.s32 6, %v904
      %v906 = vrot.slane %v814, %v905
      %v907 = vmul.f32 %v900, %v906
      %v908 = vmul.f32 %v902, %v906
      %v909 = vadd.f32 %v897, %v907
      %v910 = vadd.f32 %v898, %v908
      %v911 = vadd.f32 %v909, %v796
      %v912 = vadd.f32 %v910, %v801
      %913 = vst [vmem:[%s285] sm:$0xff] %v911
      %914 = vst [vmem:[%s285 + $0x8] sm:$0xff] %v912
      %915 = vst [vmem:[#allocation2 + $0x28] sm:$0x1] 0.0
      %916 = vst [vmem:[#allocation2 + $0x29] sm:$0xff] %v708
      %917 = vst [vmem:[#allocation2 + $0x31] sm:$0xff] %v709
      %918 = vst [vmem:[#allocation2 + $0x39] sm:$0xff] %v710
      %919 = vst [vmem:[#allocation2 + $0x41] sm:$0xff] %v711
      %920 = vst [vmem:[#allocation2 + $0x49] sm:$0x7f] 0.0
      %s921 = scalar_lea.vmem [#allocation2], 40
      %v922 = vld [vmem:[%s921] ss:$2 sm:$0xff]
      %s923 = scalar_lea.vmem [#allocation2], 56
      %v924 = vld [vmem:[%s923] ss:$2 sm:$0xff]
      %v925 = vmul.f32 %v922, %v834
      %v926 = vmul.f32 %v924, %v834
      %v927 = vadd.f32 %v820, %v925
      %v928 = vadd.f32 %v820, %v926
      %s929 = scalar_lea.vmem [#allocation2], 41
      %v930 = vld [vmem:[%s929] ss:$2 sm:$0xff]
      %s931 = scalar_lea.vmem [#allocation2], 57
      %v932 = vld [vmem:[%s931] ss:$2 sm:$0xff]
      %v933 = vmul.f32 %v930, %v846
      %v934 = vmul.f32 %v932, %v846
      %v935 = vadd.f32 %v927, %v933
      %v936 = vadd.f32 %v928, %v934
      %s937 = scalar_lea.vmem [#allocation2], 42
      %v938 = vld [vmem:[%s937] ss:$2 sm:$0xff]
      %s939 = scalar_lea.vmem [#allocation2], 58
      %v940 = vld [vmem:[%s939] ss:$2 sm:$0xff]
      %v941 = vmul.f32 %v938, %v858
      %v942 = vmul.f32 %v940, %v858
      %v943 = vadd.f32 %v935, %v941
      %v944 = vadd.f32 %v936, %v942
      %s945 = scalar_lea.vmem [#allocation2], 43
      %v946 = vld [vmem:[%s945] ss:$2 sm:$0xff]
      %s947 = scalar_lea.vmem [#allocation2], 59
      %v948 = vld [vmem:[%s947] ss:$2 sm:$0xff]
      %v949 = vmul.f32 %v946, %v870
      %v950 = vmul.f32 %v948, %v870
      %v951 = vadd.f32 %v943, %v949
      %v952 = vadd.f32 %v944, %v950
      %s953 = scalar_lea.vmem [#allocation2], 44
      %v954 = vld [vmem:[%s953] ss:$2 sm:$0xff]
      %s955 = scalar_lea.vmem [#allocation2], 60
      %v956 = vld [vmem:[%s955] ss:$2 sm:$0xff]
      %v957 = vmul.f32 %v954, %v882
      %v958 = vmul.f32 %v956, %v882
      %v959 = vadd.f32 %v951, %v957
      %v960 = vadd.f32 %v952, %v958
      %s961 = scalar_lea.vmem [#allocation2], 45
      %v962 = vld [vmem:[%s961] ss:$2 sm:$0xff]
      %s963 = scalar_lea.vmem [#allocation2], 61
      %v964 = vld [vmem:[%s963] ss:$2 sm:$0xff]
      %v965 = vmul.f32 %v962, %v894
      %v966 = vmul.f32 %v964, %v894
      %v967 = vadd.f32 %v959, %v965
      %v968 = vadd.f32 %v960, %v966
      %s969 = scalar_lea.vmem [#allocation2], 46
      %v970 = vld [vmem:[%s969] ss:$2 sm:$0xff]
      %s971 = scalar_lea.vmem [#allocation2], 62
      %v972 = vld [vmem:[%s971] ss:$2 sm:$0xff]
      %v973 = vmul.f32 %v970, %v906
      %v974 = vmul.f32 %v972, %v906
      %v975 = vadd.f32 %v967, %v973
      %v976 = vadd.f32 %v968, %v974
      %v977 = vadd.f32 %v975, %v806
      %v978 = vadd.f32 %v976, %v811
      %s979 = scalar_lea.vmem %s285, 16
      %980 = vst [vmem:[%s979] sm:$0xff] %v977
      %981 = vst [vmem:[%s979 + $0x8] sm:$0xff] %v978
      %s982 = smul.u32 2, %s18
      %p983 = scmp.lt.s32.totalorder %s982, 3
      %s984 = scalar_select %p983, %s982, 3
      %s985 = smul.addr %s984, 2
      %s986 = smul.addr %s985, 8
      %s987 = scalar_lea.vmem %s7, %s986
      // Predicated region
      $region49: #{variable_length_residual.1} parent=47 // pred_check
        %p988 = pneg %p188
      $region50: #{variable_length_residual.1} parent=47 // pred_check_branch
        %990 = sbr.rel (%p988) target = $region52
      $region51: #{variable_length_residual.1} parent=47 // pred_region
        %s991 = smul.u32 2, %s18
      $region52: #{variable_length_residual.1} parent=47 // pred_fallthru
        _
    $region48: #{variable_length_residual.1} parent=5 // pred_fallthru
      _
    %p992 = scmp.le.s32.totalorder 2, %s13
    // Predicated region
    $region53: #{variable_length_residual.1} parent=5 // pred_check
      %p993 = pneg %p992
    $region54: #{variable_length_residual.1} parent=5 // pred_check_branch
      %995 = sbr.rel (%p993) target = $region56
    $region55: #{variable_length_residual.1} parent=5 // pred_region
      %s996 = ssub.s32 %s13, 2
      // Predicated region
      $region57: #{variable_length_residual.1} parent=55 // pred_check
        %p997 = pneg %p194
      $region58: #{variable_length_residual.1} parent=55 // pred_check_branch
        %999 = sbr.rel (%p997) target = $region60
      $region59: #{variable_length_residual.1} parent=55 // pred_region
        %s1000 = smul.u32 2, %s19
        %p1001 = scmp.lt.s32.totalorder %s1000, 3
        %s1002 = scalar_select %p1001, %s1000, 3
        %s1003 = smul.addr %s1002, 2
        %s1004 = smul.addr %s1003, 8
        %s1005 = scalar_lea.vmem %s7, %s1004
      $region60: #{variable_length_residual.1} parent=55 // pred_fallthru
        _
    $region56: #{variable_length_residual.1} parent=5 // pred_fallthru
      _
  $region6: #{variable_length_residual.1} parent=0 // loop_footer
    %s17 = sadd.s32 1, %s13
  $region7: #{variable_length_residual.1} parent=0 // loop_footer_branch
    %12 = sbr.rel target = $region3
  $region8: #{variable_length_residual.1} parent=0 // loop_exit
    _

</llo_original>
